<compile_context>
chip_gen: v6e
topology: v6e:2x2x1
jax: 0.10.0
libtpu: 0.0.40
codegen_flags: <defaults>
</compile_context>

<pallas_src>
import functools
import math

import jax
import jax.numpy as jnp
from jax.experimental import pallas as pl
from jax.experimental.pallas import tpu as pltpu


def _rmsnorm_kernel(x_ref, w_ref, o_ref, *, eps):
    """Standard path: the normalized dim is the full lane axis of the block."""
    xf = x_ref[...].astype(jnp.float32)                       # (tr, dim)
    ms = jnp.mean(xf * xf, axis=-1, keepdims=True)            # (tr, 1)
    # 1 / max(sqrt(ms), eps) == min(rsqrt(ms), 1/eps); rsqrt is EUP work on a
    # (tr, 1) column only — never an elementwise divide over (tr, dim).
    inv = jnp.minimum(jax.lax.rsqrt(ms), jnp.float32(1.0 / eps))
    w = w_ref[...].astype(jnp.float32)                        # (1, dim)
    # Re-read x for the output so the f32 upcast is not live across the reduce.
    o_ref[...] = (x_ref[...].astype(jnp.float32) * inv * w).astype(o_ref.dtype)


def _rmsnorm_folded_kernel(x_ref, w_ref, seg_ref, o_ref, *, eps, dim):
    """Lane-dense path for dim < 128: g = 128 // dim logical rows per 128-lane row.
    Per-segment sums of x^2 are computed with an MXU matmul against a 0/1
    block-diagonal segment matrix. The f32 operand is split into three exact
    bf16 components so the result is f32-accurate regardless of how default
    f32 matmul emulation is configured."""
    x = x_ref[...].astype(jnp.float32)                        # (tr, 128)
    x2 = x * x
    seg = seg_ref[...]                                        # (128, 128) bf16 of 0/1
    p0 = x2.astype(jnp.bfloat16)
    r1 = x2 - p0.astype(jnp.float32)
    p1 = r1.astype(jnp.bfloat16)
    p2 = (r1 - p1.astype(jnp.float32)).astype(jnp.bfloat16)
    seg_sum = jnp.dot(p0, seg, preferred_element_type=jnp.float32)
    seg_sum = seg_sum + jnp.dot(p1, seg, preferred_element_type=jnp.float32)
    seg_sum = seg_sum + jnp.dot(p2, seg, preferred_element_type=jnp.float32)
    ms = seg_sum * jnp.float32(1.0 / dim)                     # per-lane segment mean
    inv = jnp.minimum(jax.lax.rsqrt(ms), jnp.float32(1.0 / eps))
    w = w_ref[...].astype(jnp.float32)                        # (1, 128)
    # Re-read x for the output (don't keep the f32 block live across the matmuls).
    o_ref[...] = (x_ref[...].astype(jnp.float32) * inv * w).astype(o_ref.dtype)


def _round_up(n, m):
    return ((n + m - 1) // m) * m


def _vmem_capacity_bytes():
    try:
        info = pltpu.get_tpu_info()
        cap = getattr(info, "vmem_capacity_bytes", None)
        if cap:
            return int(cap)
    except Exception:
        pass
    return 64 << 20  # conservative (v7x-sized)


def layer_norm(x, weight, eps=1e-6, *, target_block_bytes=4 << 20):
    """RMS LayerNorm matching the PyTorch module's forward.

    x: (..., dim); weight: (dim,). Normalization over the last dimension.
    """
    orig_shape = x.shape
    dim = orig_shape[-1]
    rows_src = math.prod(orig_shape[:-1])
    x2d = x.reshape(rows_src, dim)

    # Lane-dense fold for small dims (free row-major reshape in HBM).
    g = 1
    if dim < 128 and 128 % dim == 0:
        g = 128 // dim
    rows = rows_src
    if g > 1 and rows % g != 0:
        # Pad by at most g-1 rows so the fold applies; vastly cheaper than the
        # lane-masked (vst.msk) stores a <128-lane output block would cause.
        rows = _round_up(rows, g)
        x2d = jnp.pad(x2d, ((0, rows - rows_src), (0, 0)))
    rows_f = rows // g
    dim_f = dim * g
    x2d = x2d.reshape(rows_f, dim_f)
    w_row = jnp.tile(weight.reshape(1, dim), (1, g))          # (1, dim_f)

    # --- tile selection: byte-targeted, dtype- and generation-aware ----------
    in_item = x.dtype.itemsize
    out_item = x.dtype.itemsize
    sub = 8 * max(1, 4 // max(1, in_item))                    # f32:8 bf16:16 i8:32

    vmem_cap = _vmem_capacity_bytes()
    if vmem_cap > (64 << 20):        # v5e / v6e (128 MiB physical VMEM)
        vmem_budget = 48 << 20
        vmem_ceiling = 96 << 20
    else:                            # v7x (64 MiB) or unknown
        vmem_budget = 22 << 20
        vmem_ceiling = 48 << 20

    # Per-row VMEM bytes: double-buffered input + output plus ~8 B/elem of
    # in-kernel f32 temporaries.
    per_row = (2 * in_item + 2 * out_item + 8) * dim_f
    tr_cap = max(sub, (vmem_budget // per_row) // sub * sub)

    if rows_f <= sub:
        tr = rows_f                  # block == full row extent (allowed even if <8)
    else:
        tr = _round_up(max(1, target_block_bytes // (dim_f * in_item)), sub)
        tr = min(tr, tr_cap)
        # Keep >=2 grid steps so the ("parallel",) axis shards over v7x's 2 TCs.
        tr = min(tr, max(sub, _round_up(pl.cdiv(rows_f, 2), sub)))
        tr = min(tr, _round_up(rows_f, sub))
        tr = max(tr, sub)

    grid_rows = pl.cdiv(rows_f, tr)
    vmem_limit = int(min(vmem_ceiling, max(32 << 20, int(per_row * tr * 1.5))))

    compiler_params = pltpu.CompilerParams(
        dimension_semantics=("parallel",),
        vmem_limit_bytes=vmem_limit,
    )

    if g > 1:
        lane = jnp.arange(dim_f)
        seg_mat = (lane[:, None] // dim == lane[None, :] // dim).astype(jnp.bfloat16)
        kernel = functools.partial(_rmsnorm_folded_kernel, eps=eps, dim=dim)
        in_specs = [
            pl.BlockSpec((tr, dim_f), lambda i: (i, 0)),
            pl.BlockSpec((1, dim_f), lambda i: (0, 0)),
            pl.BlockSpec((dim_f, dim_f), lambda i: (0, 0)),
        ]
        args = (x2d, w_row, seg_mat)
    else:
        kernel = functools.partial(_rmsnorm_kernel, eps=eps)
        in_specs = [
            pl.BlockSpec((tr, dim_f), lambda i: (i, 0)),
            pl.BlockSpec((1, dim_f), lambda i: (0, 0)),
        ]
        args = (x2d, w_row)

    # No HBM padding of rows_f: the last row-tile may be ragged.  OOB reads are
    # garbage but each row normalizes independently and OOB stores are masked.
    out2d = pl.pallas_call(
        kernel,
        out_shape=jax.ShapeDtypeStruct((rows_f, dim_f), x.dtype),
        grid_spec=pltpu.PrefetchScalarGridSpec(
            num_scalar_prefetch=0,
            grid=(grid_rows,),
            in_specs=in_specs,
            out_specs=pl.BlockSpec((tr, dim_f), lambda i: (i, 0)),
        ),
        compiler_params=compiler_params,
    )(*args)

    out = out2d.reshape(rows, dim)
    if rows != rows_src:
        out = out[:rows_src]
    return out.reshape(orig_shape)


def _reference(x, weight, eps):
    ms = jnp.mean(x * x, axis=-1, keepdims=True)
    rms = jnp.maximum(jnp.sqrt(ms), eps)
    return x / rms * weight


if __name__ == "__main__":
    key = jax.random.PRNGKey(0)

    # Small shape consistent with the module's forward (normalized over hidden).
    batch, seq, hidden = 2, 8, 32
    x = jax.random.normal(key, (batch, seq, hidden), dtype=jnp.float32)
    weight = jnp.ones((hidden,), dtype=jnp.float32)  # nn.Parameter(torch.ones(dim))

    out = jax.block_until_ready(layer_norm(x, weight, eps=1e-6))
    ref = _reference(x, weight, 1e-6)
    assert jnp.allclose(out, ref, atol=1e-5, rtol=1e-5), "mismatch (dim=32, folded)"

    # Standard (dim >= 128) path with a ragged last row-tile (rows=15, tr=8).
    key2 = jax.random.PRNGKey(1)
    x2 = jax.random.normal(key2, (3, 5, 256), dtype=jnp.float32)
    w2 = jnp.ones((256,), dtype=jnp.float32)
    out2 = jax.block_until_ready(layer_norm(x2, w2, eps=1e-6))
    ref2 = _reference(x2, w2, 1e-6)
    assert jnp.allclose(out2, ref2, atol=1e-5, rtol=1e-5), "mismatch (dim=256, ragged)"

    # Folded path where rows % g != 0 (tiny <=g-1-row pad inside the wrapper).
    key3 = jax.random.PRNGKey(2)
    x3 = jax.random.normal(key3, (3, 5, 32), dtype=jnp.float32)
    w3 = jnp.ones((32,), dtype=jnp.float32)
    out3 = jax.block_until_ready(layer_norm(x3, w3, eps=1e-6))
    ref3 = _reference(x3, w3, 1e-6)
    assert jnp.allclose(out3, ref3, atol=1e-5, rtol=1e-5), "mismatch (dim=32, padded fold)"

    print("KERNEL_OK")
</pallas_src>

<mosaic_0001>
module attributes {stable_mosaic.version = 11 : i64} {
  func.func @_rmsnorm_folded_kernel(%arg0: i32, %arg1: memref<4x128xf32, #tpu.memory_space<vmem>>, %arg2: memref<1x128xf32, #tpu.memory_space<vmem>>, %arg3: memref<128x128xbf16, #tpu.memory_space<vmem>>, %arg4: memref<4x128xf32, #tpu.memory_space<vmem>>) attributes {dimension_semantics = [#tpu.dimension_semantics<parallel>], iteration_bounds = array<i64: 1>, scalar_prefetch = 0 : i64, scratch_operands = 0 : i64, tpu.core_type = #tpu.core_type<tc>, window_params = [{transform_indices = @transform_0, window_bounds = array<i64: 4, 128>}, {pipeline_mode = #tpu.pipeline_mode<synchronous>, transform_indices = @transform_1, window_bounds = array<i64: 1, 128>}, {pipeline_mode = #tpu.pipeline_mode<synchronous>, transform_indices = @transform_2, window_bounds = array<i64: 128, 128>}, {transform_indices = @transform_3, window_bounds = array<i64: 4, 128>}]} {
    %c0 = arith.constant 0 : index
    %c0_0 = arith.constant 0 : index
    %0 = vector.load %arg1[%c0, %c0_0] : memref<4x128xf32, #tpu.memory_space<vmem>>, vector<4x128xf32>
    %1 = arith.mulf %0, %0 : vector<4x128xf32>
    %c0_1 = arith.constant 0 : index
    %c0_2 = arith.constant 0 : index
    %2 = vector.load %arg3[%c0_1, %c0_2] : memref<128x128xbf16, #tpu.memory_space<vmem>>, vector<128x128xbf16>
    %3 = arith.truncf %1 : vector<4x128xf32> to vector<4x128xbf16>
    %4 = arith.extf %3 : vector<4x128xbf16> to vector<4x128xf32>
    %5 = arith.subf %1, %4 : vector<4x128xf32>
    %6 = arith.truncf %5 : vector<4x128xf32> to vector<4x128xbf16>
    %7 = arith.extf %6 : vector<4x128xbf16> to vector<4x128xf32>
    %8 = arith.subf %5, %7 : vector<4x128xf32>
    %9 = arith.truncf %8 : vector<4x128xf32> to vector<4x128xbf16>
    %cst = arith.constant dense<0.000000e+00> : vector<4x128xf32>
    %10 = tpu.matmul %3, %2, %cst {dimension_numbers = #tpu.dot_dimension_numbers<[1], [0], [0], [1], [0, 0, 1, 1], [], []>} : vector<4x128xbf16>, vector<128x128xbf16>, vector<4x128xf32> -> vector<4x128xf32>
    %cst_3 = arith.constant dense<0.000000e+00> : vector<4x128xf32>
    %11 = tpu.matmul %6, %2, %cst_3 {dimension_numbers = #tpu.dot_dimension_numbers<[1], [0], [0], [1], [0, 0, 1, 1], [], []>} : vector<4x128xbf16>, vector<128x128xbf16>, vector<4x128xf32> -> vector<4x128xf32>
    %12 = arith.addf %10, %11 : vector<4x128xf32>
    %cst_4 = arith.constant dense<0.000000e+00> : vector<4x128xf32>
    %13 = tpu.matmul %9, %2, %cst_4 {dimension_numbers = #tpu.dot_dimension_numbers<[1], [0], [0], [1], [0, 0, 1, 1], [], []>} : vector<4x128xbf16>, vector<128x128xbf16>, vector<4x128xf32> -> vector<4x128xf32>
    %14 = arith.addf %12, %13 : vector<4x128xf32>
    %cst_5 = arith.constant 3.125000e-02 : f32
    %15 = vector.broadcast %cst_5 : f32 to vector<4x128xf32>
    %16 = arith.mulf %14, %15 : vector<4x128xf32>
    %17 = math.rsqrt %16 : vector<4x128xf32>
    %cst_6 = arith.constant 1.000000e+06 : f32
    %18 = vector.broadcast %cst_6 : f32 to vector<4x128xf32>
    %19 = arith.minimumf %17, %18 : vector<4x128xf32>
    %c0_7 = arith.constant 0 : index
    %c0_8 = arith.constant 0 : index
    %20 = vector.load %arg2[%c0_7, %c0_8] : memref<1x128xf32, #tpu.memory_space<vmem>>, vector<1x128xf32>
    %c0_9 = arith.constant 0 : index
    %c0_10 = arith.constant 0 : index
    %21 = vector.load %arg1[%c0_9, %c0_10] : memref<4x128xf32, #tpu.memory_space<vmem>>, vector<4x128xf32>
    %22 = arith.mulf %21, %19 : vector<4x128xf32>
    %23 = vector.broadcast %20 : vector<1x128xf32> to vector<4x128xf32>
    %24 = arith.mulf %22, %23 : vector<4x128xf32>
    %c0_11 = arith.constant 0 : index
    %c0_12 = arith.constant 0 : index
    %25 = vector.load %arg4[%c0_11, %c0_12] : memref<4x128xf32, #tpu.memory_space<vmem>>, vector<4x128xf32>
    tpu.vector_store %arg4[%c0_11, %c0_12], %24 {strides = array<i32>} : memref<4x128xf32, #tpu.memory_space<vmem>>, vector<4x128xf32>,
    return
  }
  func.func @transform_0(%arg0: i32) -> (i32, i32) {
    %c0_i32 = arith.constant 0 : i32
    %c0_i32_0 = arith.constant 0 : i32
    return %arg0, %c0_i32 : i32, i32
  }
  func.func @transform_1(%arg0: i32) -> (i32, i32) {
    %c0_i32 = arith.constant 0 : i32
    %c0_i32_0 = arith.constant 0 : i32
    %c0_i32_1 = arith.constant 0 : i32
    return %c0_i32, %c0_i32_0 : i32, i32
  }
  func.func @transform_2(%arg0: i32) -> (i32, i32) {
    %c0_i32 = arith.constant 0 : i32
    %c0_i32_0 = arith.constant 0 : i32
    %c0_i32_1 = arith.constant 0 : i32
    return %c0_i32, %c0_i32_0 : i32, i32
  }
  func.func @transform_3(%arg0: i32) -> (i32, i32) {
    %c0_i32 = arith.constant 0 : i32
    %c0_i32_0 = arith.constant 0 : i32
    return %arg0, %c0_i32 : i32, i32
  }
}

</mosaic_0001>

<llo_original>
// kernel: tpu_custom_call.1
$region0: #{tpu_custom_call.1}
  #allocation0 [shape = 'u32[]', space=smem, size = 0x4, offset = 0x4, fixed_abs, tag = 'smem constant byte address 0x4 - core index']
  #allocation1 [shape = 'u32[144,128]{1,0:T(1,128)}', space=vmem, size = 0x12000, scoped, tag = 'internal scratch']
  %s0 = inlined_call_operand.hbm [shape: f32[4,128], index: 0, kind: input, shape index: {}]
  %s1 = inlined_call_operand.vmem [shape: f32[1,128], index: 1, kind: input, shape index: {}]
  %s2 = inlined_call_operand.hbm [shape: bf16[128,128], index: 2, kind: input, shape index: {}]
  %s3 = inlined_call_operand.hbm [shape: f32[4,128], index: 3, kind: output, shape index: {}]
  %s4 = sld [smem:[#allocation0]]
  $region30: #{tpu_custom_call.1} parent=0
    _
  %s6 = ssub.s32 1, %s4
  %s7 = scalar_select 0, %s6, %s4
  $region1: #{tpu_custom_call.1} parent=0
    #allocation2 [shape = 'u8[2048]{0}', space=vmem, size = 0x800, scoped, tag = 'input window, operand 0, single buffered']
    #allocation3 [shape = 's32[1]{0}', space=sflag, size = 0x4, scoped, tag = 'scoped memory for tpu_custom_call.1']
    #allocation4 [shape = 's32[1]{0}', space=sflag, size = 0x4, scoped, tag = 'scoped memory for tpu_custom_call.1']
    #allocation5 [shape = 'u8[32768]{0}', space=vmem, size = 0x8000, scoped, tag = 'input window, operand 2, single buffered']
    #allocation6 [shape = 's32[1]{0}', space=sflag, size = 0x4, scoped, tag = 'scoped memory for tpu_custom_call.1']
    #allocation7 [shape = 'u8[2048]{0}', space=vmem, size = 0x800, scoped, tag = 'output window, operand 0, single buffered']
    %8 = vsyncpa [#allocation3], 0
    %9 = vsyncpa [#allocation6], 0
    %10 = vsyncpa [#allocation4], 0
    // Predicated region
    $region2: #{tpu_custom_call.1} parent=1 // pred_check
      _
    $region3: #{tpu_custom_call.1} parent=1 // pred_check_branch
      %12 = sbr.rel (0) target = $region5
    $region4: #{tpu_custom_call.1} parent=1 // pred_region
      %s14 = ssub.s32 64, 64
      %15 = vsyncadd [#allocation3], %s14
      %s17 = sshll.u32 [#allocation2], 4
      %s18 = int_to_ptr.vmem [resolvable:$true] %s17
      %20 = dma.hbm_to_vmem [thread:$0]  %s0, 64, %s18, [#allocation3]
    $region5: #{tpu_custom_call.1} parent=1 // pred_fallthru
      _
    // Predicated region
    $region6: #{tpu_custom_call.1} parent=1 // pred_check
      _
    $region7: #{tpu_custom_call.1} parent=1 // pred_check_branch
      %22 = sbr.rel (0) target = $region9
    $region8: #{tpu_custom_call.1} parent=1 // pred_region
      _
    $region9: #{tpu_custom_call.1} parent=1 // pred_fallthru
      _
    // Predicated region
    $region10: #{tpu_custom_call.1} parent=1 // pred_check
      _
    $region11: #{tpu_custom_call.1} parent=1 // pred_check_branch
      %24 = sbr.rel (0) target = $region13
    $region12: #{tpu_custom_call.1} parent=1 // pred_region
      %s26 = ssub.s32 1024, 1024
      %27 = vsyncadd [#allocation6], %s26
      %s28 = sshll.u32 [#allocation5], 4
      %s29 = int_to_ptr.vmem [resolvable:$true] %s28
      %34 = dma.hbm_to_vmem [thread:$0]  %s2, 1024, %s29, [#allocation6], 64, 64, 4
    $region13: #{tpu_custom_call.1} parent=1 // pred_fallthru
      _
    // Predicated region
    $region14: #{tpu_custom_call.1} parent=1 // pred_check
      _
    $region15: #{tpu_custom_call.1} parent=1 // pred_check_branch
      %36 = sbr.rel (0) target = $region17
    $region16: #{tpu_custom_call.1} parent=1 // pred_region
      %37 = dma.done [#allocation3], 64
    $region17: #{tpu_custom_call.1} parent=1 // pred_fallthru
      _
    // Predicated region
    $region18: #{tpu_custom_call.1} parent=1 // pred_check
      _
    $region19: #{tpu_custom_call.1} parent=1 // pred_check_branch
      %39 = sbr.rel (0) target = $region21
    $region20: #{tpu_custom_call.1} parent=1 // pred_region
      %40 = dma.done [#allocation6], 1024
    $region21: #{tpu_custom_call.1} parent=1 // pred_fallthru
      _
    %v42 = vld [vmem:[#allocation2] sm:$0xf]
    %v43 = vmul.f32 %v42, %v42
    %v44 = vld [vmem:[#allocation5] sm:$0xf]
    %v45 = vld [vmem:[#allocation5 + $0x4] sm:$0xf]
    %v46 = vld [vmem:[#allocation5 + $0x8] sm:$0xf]
    %v47 = vld [vmem:[#allocation5 + $0xc] sm:$0xf]
    %v48 = vld [vmem:[#allocation5 + $0x10] sm:$0xf]
    %v49 = vld [vmem:[#allocation5 + $0x14] sm:$0xf]
    %v50 = vld [vmem:[#allocation5 + $0x18] sm:$0xf]
    %v51 = vld [vmem:[#allocation5 + $0x1c] sm:$0xf]
    %v52 = vld [vmem:[#allocation5 + $0x20] sm:$0xf]
    %v53 = vld [vmem:[#allocation5 + $0x24] sm:$0xf]
    %v54 = vld [vmem:[#allocation5 + $0x28] sm:$0xf]
    %v55 = vld [vmem:[#allocation5 + $0x2c] sm:$0xf]
    %v56 = vld [vmem:[#allocation5 + $0x30] sm:$0xf]
    %v57 = vld [vmem:[#allocation5 + $0x34] sm:$0xf]
    %v58 = vld [vmem:[#allocation5 + $0x38] sm:$0xf]
    %v59 = vld [vmem:[#allocation5 + $0x3c] sm:$0xf]
    %v60 = vpack.c.bf16 %v43, %v43
    %v61 = vunpack.c.l.bf16 %v60
    %v62 = vsub.f32 %v43, %v61
    %v63 = vpack.c.bf16 %v62, %v62
    %v64 = vunpack.c.l.bf16 %v63
    %v65 = vsub.f32 %v62, %v64
    %v66 = vpack.c.bf16 %v65, %v65
    %v83 = vunpack.c.l.b16 %v44
    %v84 = vunpack.c.l.b16 %v45
    %v85 = vunpack.c.l.b16 %v46
    %v86 = vunpack.c.l.b16 %v47
    %v87 = vunpack.c.l.b16 %v48
    %v88 = vunpack.c.l.b16 %v49
    %v89 = vunpack.c.l.b16 %v50
    %v90 = vunpack.c.l.b16 %v51
    %v91 = vunpack.c.l.b16 %v52
    %v92 = vunpack.c.l.b16 %v53
    %v93 = vunpack.c.l.b16 %v54
    %v94 = vunpack.c.l.b16 %v55
    %v95 = vunpack.c.l.b16 %v56
    %v96 = vunpack.c.l.b16 %v57
    %v97 = vunpack.c.l.b16 %v58
    %v98 = vunpack.c.l.b16 %v59
    %v99 = vpack.c.b16 %v84, %v83
    %v100 = vpack.c.b16 %v86, %v85
    %v101 = vpack.c.b16 %v88, %v87
    %v102 = vpack.c.b16 %v90, %v89
    %v103 = vpack.c.b16 %v92, %v91
    %v104 = vpack.c.b16 %v94, %v93
    %v105 = vpack.c.b16 %v96, %v95
    %v106 = vpack.c.b16 %v98, %v97
    %115 = vmatprep.subr.bf16.mxu0 0
    %116 = vmatpush1.bf16.msra.mxu0 %v106
    %117 = vmatprep.subr.bf16.mxu0 0
    %118 = vmatpush1.bf16.msra.mxu0 %v105
    %119 = vmatprep.subr.bf16.mxu0 0
    %120 = vmatpush1.bf16.msra.mxu0 %v104
    %121 = vmatprep.subr.bf16.mxu0 0
    %122 = vmatpush1.bf16.msra.mxu0 %v103
    %123 = vmatprep.subr.bf16.mxu0 0
    %124 = vmatpush1.bf16.msra.mxu0 %v102
    %125 = vmatprep.subr.bf16.mxu0 0
    %126 = vmatpush1.bf16.msra.mxu0 %v101
    %127 = vmatprep.subr.bf16.mxu0 0
    %128 = vmatpush1.bf16.msra.mxu0 %v100
    %129 = vmatprep.subr.bf16.mxu0 0
    %130 = vmatpush1.bf16.msra.mxu0 %v99
    %131 = vmatprep.subr.bf16.mxu0 0
    %132 = vmatpush2.bf16.msra.mxu0 0
    %133 = vmatprep.subr.bf16.mxu0 0
    %134 = vmatpush2.bf16.msra.mxu0 0
    %135 = vmatprep.subr.bf16.mxu0 0
    %136 = vmatpush2.bf16.msra.mxu0 0
    %137 = vmatprep.subr.bf16.mxu0 0
    %138 = vmatpush2.bf16.msra.mxu0 0
    %139 = vmatprep.subr.bf16.mxu0 0
    %140 = vmatpush2.bf16.msra.mxu0 0
    %141 = vmatprep.subr.bf16.mxu0 0
    %142 = vmatpush2.bf16.msra.mxu0 0
    %143 = vmatprep.subr.bf16.mxu0 0
    %144 = vmatpush2.bf16.msra.mxu0 0
    %145 = vmatprep.subr.bf16.mxu0 0
    %146 = vmatpush2.bf16.msra.mxu0 0
    %147 = vmatprep.mubr.bf16.mxu0 0
    %148 = vmatmul.mubr.bf16.gmra.mxu0 %v63
    %v149 = vpop.f32.mrf.mxu0
    %v150 = vadd.f32 0.0, %v149
    %v151 = vpop.f32.mrf.mxu0
    %v152 = vpop.f32.mrf.mxu0
    %v153 = vpop.f32.mrf.mxu0
    %154 = vdwg.mxu0
    %155 = vmatprep.subr.bf16.mxu0 0
    %156 = vmatpush1.bf16.msra.mxu0 %v106
    %157 = vmatprep.subr.bf16.mxu0 0
    %158 = vmatpush1.bf16.msra.mxu0 %v105
    %159 = vmatprep.subr.bf16.mxu0 0
    %160 = vmatpush1.bf16.msra.mxu0 %v104
    %161 = vmatprep.subr.bf16.mxu0 0
    %162 = vmatpush1.bf16.msra.mxu0 %v103
    %163 = vmatprep.subr.bf16.mxu0 0
    %164 = vmatpush1.bf16.msra.mxu0 %v102
    %165 = vmatprep.subr.bf16.mxu0 0
    %166 = vmatpush1.bf16.msra.mxu0 %v101
    %167 = vmatprep.subr.bf16.mxu0 0
    %168 = vmatpush1.bf16.msra.mxu0 %v100
    %169 = vmatprep.subr.bf16.mxu0 0
    %170 = vmatpush1.bf16.msra.mxu0 %v99
    %171 = vmatprep.subr.bf16.mxu0 0
    %172 = vmatpush2.bf16.msra.mxu0 0
    %173 = vmatprep.subr.bf16.mxu0 0
    %174 = vmatpush2.bf16.msra.mxu0 0
    %175 = vmatprep.subr.bf16.mxu0 0
    %176 = vmatpush2.bf16.msra.mxu0 0
    %177 = vmatprep.subr.bf16.mxu0 0
    %178 = vmatpush2.bf16.msra.mxu0 0
    %179 = vmatprep.subr.bf16.mxu0 0
    %180 = vmatpush2.bf16.msra.mxu0 0
    %181 = vmatprep.subr.bf16.mxu0 0
    %182 = vmatpush2.bf16.msra.mxu0 0
    %183 = vmatprep.subr.bf16.mxu0 0
    %184 = vmatpush2.bf16.msra.mxu0 0
    %185 = vmatprep.subr.bf16.mxu0 0
    %186 = vmatpush2.bf16.msra.mxu0 0
    %187 = vmatprep.mubr.bf16.mxu0 0
    %188 = vmatmul.mubr.bf16.gmra.mxu0 %v60
    %v189 = vpop.f32.mrf.mxu0
    %v190 = vadd.f32 %v150, %v189
    %v191 = vpop.f32.mrf.mxu0
    %v192 = vpop.f32.mrf.mxu0
    %v193 = vpop.f32.mrf.mxu0
    %194 = vdwg.mxu0
    %195 = vmatprep.subr.bf16.mxu0 0
    %196 = vmatpush1.bf16.msra.mxu0 %v106
    %197 = vmatprep.subr.bf16.mxu0 0
    %198 = vmatpush1.bf16.msra.mxu0 %v105
    %199 = vmatprep.subr.bf16.mxu0 0
    %200 = vmatpush1.bf16.msra.mxu0 %v104
    %201 = vmatprep.subr.bf16.mxu0 0
    %202 = vmatpush1.bf16.msra.mxu0 %v103
    %203 = vmatprep.subr.bf16.mxu0 0
    %204 = vmatpush1.bf16.msra.mxu0 %v102
    %205 = vmatprep.subr.bf16.mxu0 0
    %206 = vmatpush1.bf16.msra.mxu0 %v101
    %207 = vmatprep.subr.bf16.mxu0 0
    %208 = vmatpush1.bf16.msra.mxu0 %v100
    %209 = vmatprep.subr.bf16.mxu0 0
    %210 = vmatpush1.bf16.msra.mxu0 %v99
    %211 = vmatprep.subr.bf16.mxu0 0
    %212 = vmatpush2.bf16.msra.mxu0 0
    %213 = vmatprep.subr.bf16.mxu0 0
    %214 = vmatpush2.bf16.msra.mxu0 0
    %215 = vmatprep.subr.bf16.mxu0 0
    %216 = vmatpush2.bf16.msra.mxu0 0
    %217 = vmatprep.subr.bf16.mxu0 0
    %218 = vmatpush2.bf16.msra.mxu0 0
    %219 = vmatprep.subr.bf16.mxu0 0
    %220 = vmatpush2.bf16.msra.mxu0 0
    %221 = vmatprep.subr.bf16.mxu0 0
    %222 = vmatpush2.bf16.msra.mxu0 0
    %223 = vmatprep.subr.bf16.mxu0 0
    %224 = vmatpush2.bf16.msra.mxu0 0
    %225 = vmatprep.subr.bf16.mxu0 0
    %226 = vmatpush2.bf16.msra.mxu0 0
    %227 = vmatprep.mubr.bf16.mxu0 0
    %228 = vmatmul.mubr.bf16.gmra.mxu0 %v66
    %v229 = vpop.f32.mrf.mxu0
    %v230 = vadd.f32 0.0, %v229
    %v231 = vpop.f32.mrf.mxu0
    %v232 = vpop.f32.mrf.mxu0
    %v233 = vpop.f32.mrf.mxu0
    %234 = vdwg.mxu0
    %v235 = vadd.f32 %v190, %v230
    %v236 = vmul.f32 %v235, 0.03125
    %v237 = vrsqrt.pop %v236
    %v238 = vmin.f32 %v237, 1000000.0
    %v239 = vld [vmem:[%s1] sm:$0x1]
    %v240 = vmul.f32 %v42, %v238
    %v242 = vlaneseq
    %v243 = vshrl.u32 %v242, 7
    %v244 = vsub.s32 0, %v243
    %v245 = vrot.slane %v239, %v244
    %v247 = vmul.f32 %v240, %v245
    %248 = vst [vmem:[#allocation7] sm:$0xf] %v247
    // Predicated region
    $region22: #{tpu_custom_call.1} parent=1 // pred_check
      _
    $region23: #{tpu_custom_call.1} parent=1 // pred_check_branch
      %250 = sbr.rel (0) target = $region25
    $region24: #{tpu_custom_call.1} parent=1 // pred_region
      %s252 = ssub.s32 64, 64
      %253 = vsyncadd [#allocation4], %s252
      %s255 = sshll.u32 [#allocation7], 4
      %s256 = int_to_ptr.vmem [resolvable:$true] %s255
      %258 = dma.vmem_to_hbm [thread:$0]  %s256, 64, %s3, [#allocation4]
    $region25: #{tpu_custom_call.1} parent=1 // pred_fallthru
      _
    // Predicated region
    $region26: #{tpu_custom_call.1} parent=1 // pred_check
      _
    $region27: #{tpu_custom_call.1} parent=1 // pred_check_branch
      %260 = sbr.rel (0) target = $region29
    $region28: #{tpu_custom_call.1} parent=1 // pred_region
      %261 = dma.done [#allocation4], 64
    $region29: #{tpu_custom_call.1} parent=1 // pred_fallthru
      _
    %262 = vsyncpa [#allocation3], 1
    %263 = vsyncpa [#allocation6], 1
    %264 = vsyncpa [#allocation4], 1

</llo_original>
